<compile_context>
chip_gen: v5e
topology: v5e:2x2
jax: 0.10.0
libtpu: 0.0.40
codegen_flags: <defaults>
</compile_context>

<pallas_src>
import functools
import math

import jax
import jax.numpy as jnp
from jax.experimental import pallas as pl
from jax.experimental.pallas import tpu as pltpu


def _optimus_norm_kernel(x_ref, w_ref, o_ref, *, eps):
    # x_ref: (TR, E) block of rows, input dtype
    # w_ref: (1, E)  weight, float32
    # o_ref: (TR, E) output block
    x = x_ref[...]
    xf = x.astype(jnp.float32)                                 # torch: x.float()
    ms = jnp.mean(xf * xf, axis=-1, keepdims=True)             # (TR, 1), XLU reduce
    inv = jax.lax.rsqrt(ms + eps)                              # EUP slot
    normed = (xf * inv).astype(x_ref.dtype)                    # torch: .type_as(x)
    out = normed * w_ref[...]                                  # x * weight
    o_ref[...] = out.astype(o_ref.dtype)


def _pick_block_rows(n):
    # Largest convenient sublane-aligned tile that evenly divides n.
    for tr in (1024, 512, 256, 128, 64, 32, 16, 8):
        if n % tr == 0:
            return tr
    return n  # tiny / odd row counts: single full block


def optimus_norm(x, weight, eps=1e-5):
    """RMSNorm over the last dim, matching OptimusNorm.forward."""
    orig_shape = x.shape
    E = orig_shape[-1]
    N = math.prod(orig_shape[:-1]) if len(orig_shape) > 1 else 1

    x2d = x.reshape(N, E)
    w2d = weight.astype(jnp.float32).reshape(1, E)
    out_dtype = jnp.promote_types(x.dtype, jnp.float32)  # torch promotion of x*weight

    TR = _pick_block_rows(N)
    kernel = functools.partial(_optimus_norm_kernel, eps=eps)

    # TODO(synk): for very large E (>~16K f32) the row block could additionally
    # be tiled over E with a two-pass mean, but typical embed dims fit easily.
    out = pl.pallas_call(
        kernel,
        out_shape=jax.ShapeDtypeStruct((N, E), out_dtype),
        grid_spec=pltpu.PrefetchScalarGridSpec(
            num_scalar_prefetch=0,
            grid=(N // TR,),
            in_specs=[
                pl.BlockSpec((TR, E), lambda i: (i, 0)),
                pl.BlockSpec((1, E), lambda i: (0, 0)),
            ],
            out_specs=pl.BlockSpec((TR, E), lambda i: (i, 0)),
        ),
        compiler_params=pltpu.CompilerParams(
            dimension_semantics=("parallel",),
        ),
    )(x2d, w2d)

    return out.reshape(orig_shape)


def optimus_norm_ref(x, weight, eps=1e-5):
    """Pure-JAX reference mirroring the PyTorch forward exactly."""
    xf = x.astype(jnp.float32)
    inv = jax.lax.rsqrt(jnp.mean(xf * xf, axis=-1, keepdims=True) + eps)
    normed = (xf * inv).astype(x.dtype)
    return normed * weight.astype(jnp.float32)


if __name__ == "__main__":
    B, S, E = 2, 8, 32
    key = jax.random.PRNGKey(0)
    kx, kw = jax.random.split(key)

    x = jax.random.normal(kx, (B, S, E), dtype=jnp.float32)
    # Module initializes weight to ones; use a non-trivial scale to actually
    # exercise the elementwise weight multiply.
    weight = jax.random.uniform(kw, (E,), jnp.float32, minval=0.5, maxval=1.5)

    out = optimus_norm(x, weight)
    out = jax.block_until_ready(out)

    ref = optimus_norm_ref(x, weight)
    assert out.shape == (B, S, E)
    assert jnp.allclose(out, ref, atol=1e-6, rtol=1e-6), (
        f"max abs err {jnp.max(jnp.abs(out - ref))}"
    )
    print("KERNEL_OK")
</pallas_src>

<mosaic_0001>
module attributes {stable_mosaic.version = 11 : i64} {
  func.func @_optimus_norm_kernel(%arg0: i32, %arg1: memref<16x32xf32, #tpu.memory_space<vmem>>, %arg2: memref<1x32xf32, #tpu.memory_space<vmem>>, %arg3: memref<16x32xf32, #tpu.memory_space<vmem>>) attributes {dimension_semantics = [#tpu.dimension_semantics<parallel>], iteration_bounds = array<i64: 1>, scalar_prefetch = 0 : i64, scratch_operands = 0 : i64, tpu.core_type = #tpu.core_type<tc>, window_params = [{transform_indices = @transform_0, window_bounds = array<i64: 16, 32>}, {pipeline_mode = #tpu.pipeline_mode<synchronous>, transform_indices = @transform_1, window_bounds = array<i64: 1, 32>}, {transform_indices = @transform_2, window_bounds = array<i64: 16, 32>}]} {
    %c0 = arith.constant 0 : index
    %c0_0 = arith.constant 0 : index
    %0 = vector.load %arg1[%c0, %c0_0] : memref<16x32xf32, #tpu.memory_space<vmem>>, vector<16x32xf32>
    %1 = arith.mulf %0, %0 : vector<16x32xf32>
    %cst = arith.constant dense<0.000000e+00> : vector<16xf32>
    %2 = vector.multi_reduction <add>, %1, %cst [1] : vector<16x32xf32> to vector<16xf32>
    %3 = vector.shape_cast %2 : vector<16xf32> to vector<16x1xf32>
    %cst_1 = arith.constant 3.200000e+01 : f32
    %4 = vector.broadcast %cst_1 : f32 to vector<16x1xf32>
    %5 = arith.divf %3, %4 : vector<16x1xf32>
    %cst_2 = arith.constant 9.99999974E-6 : f32
    %6 = vector.broadcast %cst_2 : f32 to vector<16x1xf32>
    %7 = arith.addf %5, %6 : vector<16x1xf32>
    %8 = math.rsqrt %7 : vector<16x1xf32>
    %9 = vector.broadcast %8 : vector<16x1xf32> to vector<16x32xf32>
    %10 = arith.mulf %0, %9 : vector<16x32xf32>
    %c0_3 = arith.constant 0 : index
    %c0_4 = arith.constant 0 : index
    %11 = vector.load %arg2[%c0_3, %c0_4] : memref<1x32xf32, #tpu.memory_space<vmem>>, vector<1x32xf32>
    %12 = vector.broadcast %11 : vector<1x32xf32> to vector<16x32xf32>
    %13 = arith.mulf %10, %12 : vector<16x32xf32>
    %c0_5 = arith.constant 0 : index
    %c0_6 = arith.constant 0 : index
    %14 = vector.load %arg3[%c0_5, %c0_6] : memref<16x32xf32, #tpu.memory_space<vmem>>, vector<16x32xf32>
    tpu.vector_store %arg3[%c0_5, %c0_6], %13 {strides = array<i32>} : memref<16x32xf32, #tpu.memory_space<vmem>>, vector<16x32xf32>,
    return
  }
  func.func @transform_0(%arg0: i32) -> (i32, i32) {
    %c0_i32 = arith.constant 0 : i32
    %c0_i32_0 = arith.constant 0 : i32
    return %arg0, %c0_i32 : i32, i32
  }
  func.func @transform_1(%arg0: i32) -> (i32, i32) {
    %c0_i32 = arith.constant 0 : i32
    %c0_i32_0 = arith.constant 0 : i32
    %c0_i32_1 = arith.constant 0 : i32
    return %c0_i32, %c0_i32_0 : i32, i32
  }
  func.func @transform_2(%arg0: i32) -> (i32, i32) {
    %c0_i32 = arith.constant 0 : i32
    %c0_i32_0 = arith.constant 0 : i32
    return %arg0, %c0_i32 : i32, i32
  }
}

</mosaic_0001>

<llo_original>
// kernel: tpu_custom_call.1
$region0: #{tpu_custom_call.1}
  #allocation0 [shape = 'u32[]', space=smem, size = 0x4, offset = 0x4, fixed_abs, tag = 'smem constant byte address 0x4 - core index']
  #allocation1 [shape = 'u32[72,128]{1,0:T(1,128)}', space=vmem, size = 0x9000, scoped, tag = 'internal scratch']
  %s0 = inlined_call_operand.hbm [shape: f32[16,32], index: 0, kind: input, shape index: {}]
  %s1 = inlined_call_operand.hbm [shape: f32[1,32], index: 1, kind: input, shape index: {}]
  %s2 = inlined_call_operand.hbm [shape: f32[16,32], index: 2, kind: output, shape index: {}]
  %s3 = sld [smem:[#allocation0]]
  $region26: #{tpu_custom_call.1} parent=0
    _
  %s5 = ssub.s32 1, %s3
  %s6 = scalar_select 0, %s5, %s3
  $region1: #{tpu_custom_call.1} parent=0
    #allocation2 [shape = 'u8[8192]{0}', space=vmem, size = 0x2000, scoped, tag = 'input window, operand 0, single buffered']
    #allocation3 [shape = 's32[1]{0}', space=sflag, size = 0x4, scoped, tag = 'scoped memory for tpu_custom_call.1']
    #allocation4 [shape = 's32[1]{0}', space=sflag, size = 0x4, scoped, tag = 'scoped memory for tpu_custom_call.1']
    #allocation5 [shape = 'u8[512]{0}', space=vmem, size = 0x400, scoped, tag = 'input window, operand 1, single buffered']
    #allocation6 [shape = 's32[1]{0}', space=sflag, size = 0x4, scoped, tag = 'scoped memory for tpu_custom_call.1']
    #allocation7 [shape = 'u8[8192]{0}', space=vmem, size = 0x2000, scoped, tag = 'output window, operand 0, single buffered']
    %7 = vsyncpa [#allocation3], 0
    %8 = vsyncpa [#allocation6], 0
    %9 = vsyncpa [#allocation4], 0
    // Predicated region
    $region2: #{tpu_custom_call.1} parent=1 // pred_check
      _
    $region3: #{tpu_custom_call.1} parent=1 // pred_check_branch
      %11 = sbr.rel (0) target = $region5
    $region4: #{tpu_custom_call.1} parent=1 // pred_region
      %13 = vsyncadd [#allocation3], 0
      %s14 = sshll.u32 %s0, 4
      %s15 = int_to_ptr.hbm [resolvable:$true] %s14
      %s16 = sshll.u32 [#allocation2], 4
      %s17 = int_to_ptr.vmem [resolvable:$true] %s16
      %22 = dma.hbm_to_vmem [thread:$0]  %s15, 256, %s17, [#allocation3], 128, 128, 8
    $region5: #{tpu_custom_call.1} parent=1 // pred_fallthru
      _
    // Predicated region
    $region6: #{tpu_custom_call.1} parent=1 // pred_check
      _
    $region7: #{tpu_custom_call.1} parent=1 // pred_check_branch
      %24 = sbr.rel (0) target = $region9
    $region8: #{tpu_custom_call.1} parent=1 // pred_region
      %26 = vsyncadd [#allocation6], 0
      %s28 = sshll.u32 %s1, 4
      %s29 = int_to_ptr.hbm [resolvable:$true] %s28
      %s30 = sshll.u32 [#allocation5], 4
      %s31 = int_to_ptr.vmem [resolvable:$true] %s30
      %33 = dma.hbm_to_vmem [thread:$0]  %s29, 16, %s31, [#allocation6]
    $region9: #{tpu_custom_call.1} parent=1 // pred_fallthru
      _
    // Predicated region
    $region10: #{tpu_custom_call.1} parent=1 // pred_check
      _
    $region11: #{tpu_custom_call.1} parent=1 // pred_check_branch
      %35 = sbr.rel (0) target = $region13
    $region12: #{tpu_custom_call.1} parent=1 // pred_region
      %37 = dma.done [#allocation3], 256
    $region13: #{tpu_custom_call.1} parent=1 // pred_fallthru
      _
    // Predicated region
    $region14: #{tpu_custom_call.1} parent=1 // pred_check
      _
    $region15: #{tpu_custom_call.1} parent=1 // pred_check_branch
      %39 = sbr.rel (0) target = $region17
    $region16: #{tpu_custom_call.1} parent=1 // pred_region
      %41 = dma.done [#allocation6], 16
    $region17: #{tpu_custom_call.1} parent=1 // pred_fallthru
      _
    %v42 = vld [vmem:[#allocation2] sm:$0xff]
    %v43 = vld [vmem:[#allocation2 + $0x8] sm:$0xff]
    %v44 = vmul.f32 %v42, %v42
    %v45 = vmul.f32 %v43, %v43
    %vm46 = vcmask 261120
    %v47 = vsel %vm46, %v44, 0.0
    %48 = vadd.xlane.f32.xlu0 %v47
    %v49 = vpop.xlane.xlu0 %48
    %v50 = vsel %vm46, %v45, 0.0
    %51 = vadd.xlane.f32.xlu0 %v50
    %v52 = vpop.xlane.xlu0 %51
    %v53 = vrcp.pop 32.0
    %v54 = vmul.f32 32.0, %v53
    %v55 = vsub.f32 1.0, %v54
    %v56 = vmul.f32 %v53, %v55
    %v57 = vadd.f32 %v53, %v56
    %vm58 = vweird.f32 %v53
    %v59 = vsel %vm58, %v53, %v57
    %v60 = vmul.f32 %v49, %v59
    %v61 = vmul.f32 %v52, %v59
    %v62 = vadd.f32 %v60, 1e-05
    %v63 = vadd.f32 %v61, 1e-05
    %v64 = vrsqrt.pop %v62
    %v65 = vmul.f32 %v64, %v62
    %v66 = vmul.f32 %v65, %v64
    %v67 = vmul.f32 0.5, %v66
    %v68 = vsub.f32 1.5, %v67
    %v69 = vmul.f32 %v64, %v68
    %vm70 = vweird.f32 %v62
    %vm71 = vweird.f32 %v64
    %vm72 = vmor %vm70, %vm71
    %v73 = vsel %vm72, %v64, %v69
    %v74 = vrsqrt.pop %v63
    %v75 = vmul.f32 %v74, %v63
    %v76 = vmul.f32 %v75, %v74
    %v77 = vmul.f32 0.5, %v76
    %v78 = vsub.f32 1.5, %v77
    %v79 = vmul.f32 %v74, %v78
    %vm80 = vweird.f32 %v63
    %vm81 = vweird.f32 %v74
    %vm82 = vmor %vm80, %vm81
    %v83 = vsel %vm82, %v74, %v79
    %v84 = vmul.f32 %v42, %v73
    %v85 = vmul.f32 %v43, %v83
    %v86 = vld [vmem:[#allocation5] sm:$0x1]
    %v88 = vperm.slane %v86, 0
    %v90 = vmul.f32 %v84, %v88
    %v91 = vmul.f32 %v85, %v88
    %92 = vst.msk [vmem:[#allocation7] sm:$0xff] %vm46, %v90
    %93 = vst.msk [vmem:[#allocation7 + $0x8] sm:$0xff] %vm46, %v91
    // Predicated region
    $region18: #{tpu_custom_call.1} parent=1 // pred_check
      _
    $region19: #{tpu_custom_call.1} parent=1 // pred_check_branch
      %95 = sbr.rel (0) target = $region21
    $region20: #{tpu_custom_call.1} parent=1 // pred_region
      %97 = vsyncadd [#allocation4], 0
      %s98 = sshll.u32 [#allocation7], 4
      %s99 = int_to_ptr.vmem [resolvable:$true] %s98
      %s100 = sshll.u32 %s2, 4
      %s101 = int_to_ptr.hbm [resolvable:$true] %s100
      %106 = dma.vmem_to_hbm [thread:$0]  %s99, 256, %s101, [#allocation4], 128, 128, 8
    $region21: #{tpu_custom_call.1} parent=1 // pred_fallthru
      _
    // Predicated region
    $region22: #{tpu_custom_call.1} parent=1 // pred_check
      _
    $region23: #{tpu_custom_call.1} parent=1 // pred_check_branch
      %108 = sbr.rel (0) target = $region25
    $region24: #{tpu_custom_call.1} parent=1 // pred_region
      %110 = dma.done [#allocation4], 256
    $region25: #{tpu_custom_call.1} parent=1 // pred_fallthru
      _
    %111 = vsyncpa [#allocation3], 1
    %112 = vsyncpa [#allocation6], 1
    %113 = vsyncpa [#allocation4], 1

</llo_original>
